<compile_context>
chip_gen: v6e
topology: v6e:2x2x1
jax: 0.10.0
libtpu: 0.0.40
codegen_flags: <defaults>
</compile_context>

<pallas_src>
import functools

import jax
import jax.numpy as jnp
from jax.experimental import pallas as pl
from jax.experimental.pallas import tpu as pltpu


def _round_up(x: int, m: int) -> int:
    return (x + m - 1) // m * m


def _largest_tile(padded_dim: int, cap: int) -> int:
    """Largest multiple of 128 that divides `padded_dim` (itself a multiple of
    128) and is <= cap.  Falls back to 128."""
    best = 128
    d = 128
    limit = min(cap, padded_dim)
    while d <= limit:
        if padded_dim % d == 0:
            best = d
        d += 128
    return best


# --------------------------------------------------------------------------
# Kernels
# --------------------------------------------------------------------------
def _linear_kernel_acc(x_ref, w_ref, o_ref, acc_ref):
    # x_ref:  [tm, tk]   activation tile
    # w_ref:  [tk, tn]   pre-transposed weight tile (canonical MXU feed)
    # o_ref:  [tm, tn]   output tile (resident across the K axis)
    # acc_ref:[tm, tn]   f32 accumulator scratch
    @pl.when(pl.program_id(2) == 0)
    def _():
        acc_ref[...] = jnp.zeros_like(acc_ref)

    acc_ref[...] += jnp.dot(
        x_ref[...], w_ref[...], preferred_element_type=jnp.float32
    )

    @pl.when(pl.program_id(2) == pl.num_programs(2) - 1)
    def _():
        o_ref[...] = acc_ref[...].astype(o_ref.dtype)


def _linear_kernel_single(x_ref, w_ref, o_ref):
    # Single K step: write directly, no accumulator round trips.
    o_ref[...] = jnp.dot(
        x_ref[...], w_ref[...], preferred_element_type=jnp.float32
    ).astype(o_ref.dtype)


# --------------------------------------------------------------------------
# pallas_call wrapper (operates on already-padded operands)
# --------------------------------------------------------------------------
@functools.partial(jax.jit, static_argnames=("tm", "tn", "tk"))
def _linear_padded(x_p, w_p, *, tm, tn, tk):
    M, K = x_p.shape
    Kw, N = w_p.shape
    assert K == Kw, "padded K mismatch between x and prepared weight"
    assert M % tm == 0 and N % tn == 0 and K % tk == 0

    out_dtype = x_p.dtype
    in_size = jnp.dtype(x_p.dtype).itemsize
    out_size = jnp.dtype(out_dtype).itemsize
    grid_k = K // tk

    # Bytes accessed including re-fetch across the non-owning grid axes.
    cost = pl.CostEstimate(
        flops=2 * M * N * K,
        transcendentals=0,
        bytes_accessed=(N // tn) * M * K * in_size
        + (M // tm) * N * K * in_size
        + M * N * out_size,
    )

    # Double-buffered inputs + double-buffered output (+ f32 accumulator).
    footprint = 2 * (tm * tk + tk * tn) * in_size + 2 * tm * tn * out_size
    if grid_k > 1:
        footprint += tm * tn * 4
    # 32 MiB is safe on all generations (v7x physical VMEM is 64 MiB); never
    # ask for more than 48 MiB.
    vmem_limit = int(min(max(2 * footprint, 32 * 1024 * 1024), 48 * 1024 * 1024))

    if grid_k == 1:
        # Fast path: whole reduction fits a single tile.
        return pl.pallas_call(
            _linear_kernel_single,
            out_shape=jax.ShapeDtypeStruct((M, N), out_dtype),
            grid_spec=pltpu.PrefetchScalarGridSpec(
                num_scalar_prefetch=0,
                grid=(M // tm, N // tn),
                in_specs=[
                    pl.BlockSpec((tm, tk), lambda i, j: (i, 0)),
                    pl.BlockSpec((tk, tn), lambda i, j: (0, j)),
                ],
                out_specs=pl.BlockSpec((tm, tn), lambda i, j: (i, j)),
            ),
            compiler_params=pltpu.CompilerParams(
                dimension_semantics=("parallel", "parallel"),
                vmem_limit_bytes=vmem_limit,
            ),
            cost_estimate=cost,
        )(x_p, w_p)

    return pl.pallas_call(
        _linear_kernel_acc,
        out_shape=jax.ShapeDtypeStruct((M, N), out_dtype),
        grid_spec=pltpu.PrefetchScalarGridSpec(
            num_scalar_prefetch=0,
            grid=(M // tm, N // tn, grid_k),
            in_specs=[
                pl.BlockSpec((tm, tk), lambda i, j, k: (i, k)),
                pl.BlockSpec((tk, tn), lambda i, j, k: (k, j)),
            ],
            out_specs=pl.BlockSpec((tm, tn), lambda i, j, k: (i, j)),
            scratch_shapes=[pltpu.VMEM((tm, tn), jnp.float32)],
        ),
        compiler_params=pltpu.CompilerParams(
            dimension_semantics=("parallel", "parallel", "arbitrary"),
            vmem_limit_bytes=vmem_limit,
        ),
        cost_estimate=cost,
    )(x_p, w_p)


# --------------------------------------------------------------------------
# Module-equivalent wrapper: one-time weight prep, per-call x handling only
# --------------------------------------------------------------------------
class PallasLinear:
    """Pallas-TPU equivalent of ProstaNet Layer.Linear (nn.Linear, bias=False).

    Weight (PyTorch layout [dim_out, dim_in]) is transposed and zero-padded
    ONCE at construction, so the per-call path only (optionally) pads x and
    launches the kernel.
    """

    def __init__(self, weight, *, tm_max=512, tn_max=512):
        weight = jnp.asarray(weight)
        assert weight.ndim == 2, "weight must be [dim_out, dim_in]"
        self.dim_out, self.dim_in = weight.shape
        self.dtype = weight.dtype
        self.tm_max = tm_max
        self.tn_max = tn_max

        # Hoisted, one-time weight prep: transpose to [dim_in, dim_out] and pad
        # both dims to multiples of 128 (lane-dense tiles, canonical MXU feed).
        self.K_pad = _round_up(self.dim_in, 128)
        self.N_pad = _round_up(self.dim_out, 128)
        w_t = weight.T
        if (self.K_pad, self.N_pad) != (self.dim_in, self.dim_out):
            w_t = jnp.pad(
                w_t,
                ((0, self.K_pad - self.dim_in), (0, self.N_pad - self.dim_out)),
            )
        self.w_prepared = jax.device_put(w_t)

        itemsize = jnp.dtype(self.dtype).itemsize
        # Sublane packing: f32 -> 8, bf16 -> 16, int8/fp8 -> 32.
        self._sublane = {4: 8, 2: 16, 1: 32}.get(itemsize, 8)
        # Bigger K tiles for narrow dtypes (same VMEM budget).
        self._tk_cap = 1024 if itemsize <= 2 else 512

    def __call__(self, x):
        x = jnp.asarray(x)
        assert x.shape[-1] == self.dim_in, "last dim of x must equal dim_in"
        lead_shape = x.shape[:-1]
        x2 = x.reshape(-1, self.dim_in)

        # Enforce matching MXU operand dtypes (avoid silent slow f32 promotion).
        if x2.dtype != self.dtype:
            x2 = x2.astype(self.dtype)

        batch = x2.shape[0]

        # Tile selection.
        tm = min(self.tm_max, _round_up(batch, self._sublane))
        M = _round_up(batch, tm)
        tk = _largest_tile(self.K_pad, self._tk_cap)
        tn = _largest_tile(self.N_pad, self.tn_max)
        # v7x megacore: if there is only one M tile, keep >= 2 N tiles so both
        # TensorCores get work (harmless on single-TC v5e/v6e).
        if M // tm == 1 and self.N_pad >= 256:
            tn = min(tn, _largest_tile(self.N_pad, self.N_pad // 2))

        # Pad x only when ragged (weight is already prepared).
        if (M, self.K_pad) != (batch, self.dim_in):
            x2 = jnp.pad(
                x2, ((0, M - batch), (0, self.K_pad - self.dim_in))
            )

        y = _linear_padded(x2, self.w_prepared, tm=tm, tn=tn, tk=tk)

        # Slice away padding and restore leading dims.
        if (M, self.N_pad) != (batch, self.dim_out):
            y = y[:batch, : self.dim_out]
        return y.reshape(lead_shape + (self.dim_out,))


# --------------------------------------------------------------------------
if __name__ == "__main__":
    key = jax.random.PRNGKey(0)
    k_x, k_w, k_x2, k_w2 = jax.random.split(key, 4)

    # --- test 1: small shapes consistent with the module (single-K fast path)
    batch, dim_in, dim_out = 8, 32, 64
    x = jax.random.normal(k_x, (batch, dim_in), dtype=jnp.float32)
    bound = 1.0 / jnp.sqrt(jnp.float32(dim_in))
    weight = jax.random.uniform(
        k_w, (dim_out, dim_in), dtype=jnp.float32, minval=-bound, maxval=bound
    )

    layer = PallasLinear(weight)
    y = layer(x)
    jax.block_until_ready(y)

    y_ref = x @ weight.T
    assert y.shape == (batch, dim_out)
    assert jnp.allclose(y, y_ref, atol=1e-5, rtol=1e-5)

    # --- test 2: ragged dims + multi-K-step accumulator path
    b2, di2, do2 = 5, 640, 300
    x2 = jax.random.normal(k_x2, (b2, di2), dtype=jnp.float32)
    bound2 = 1.0 / jnp.sqrt(jnp.float32(di2))
    w2 = jax.random.uniform(
        k_w2, (do2, di2), dtype=jnp.float32, minval=-bound2, maxval=bound2
    )
    layer2 = PallasLinear(w2)
    y2 = layer2(x2)
    jax.block_until_ready(y2)
    y2_ref = x2 @ w2.T
    assert y2.shape == (b2, do2)
    assert jnp.allclose(y2, y2_ref, atol=1e-4, rtol=1e-4)

    print("KERNEL_OK")
</pallas_src>

<mosaic_0001>
module attributes {stable_mosaic.version = 11 : i64} {
  func.func @_linear_kernel_single(%arg0: i32, %arg1: i32, %arg2: memref<8x128xf32, #tpu.memory_space<vmem>>, %arg3: memref<128x128xf32, #tpu.memory_space<vmem>>, %arg4: memref<8x128xf32, #tpu.memory_space<vmem>>) attributes {dimension_semantics = [#tpu.dimension_semantics<parallel>, #tpu.dimension_semantics<parallel>], iteration_bounds = array<i64: 1, 1>, scalar_prefetch = 0 : i64, scratch_operands = 0 : i64, tpu.core_type = #tpu.core_type<tc>, window_params = [{transform_indices = @transform_0, window_bounds = array<i64: 8, 128>}, {transform_indices = @transform_1, window_bounds = array<i64: 128, 128>}, {transform_indices = @transform_2, window_bounds = array<i64: 8, 128>}]} {
    %c0 = arith.constant 0 : index
    %c0_0 = arith.constant 0 : index
    %0 = vector.load %arg2[%c0, %c0_0] : memref<8x128xf32, #tpu.memory_space<vmem>>, vector<8x128xf32>
    %c0_1 = arith.constant 0 : index
    %c0_2 = arith.constant 0 : index
    %1 = vector.load %arg3[%c0_1, %c0_2] : memref<128x128xf32, #tpu.memory_space<vmem>>, vector<128x128xf32>
    %cst = arith.constant dense<0.000000e+00> : vector<8x128xf32>
    %2 = tpu.matmul %0, %1, %cst {dimension_numbers = #tpu.dot_dimension_numbers<[1], [0], [0], [1], [0, 0, 1, 1], [], []>} : vector<8x128xf32>, vector<128x128xf32>, vector<8x128xf32> -> vector<8x128xf32>
    %c0_3 = arith.constant 0 : index
    %c0_4 = arith.constant 0 : index
    %3 = vector.load %arg4[%c0_3, %c0_4] : memref<8x128xf32, #tpu.memory_space<vmem>>, vector<8x128xf32>
    tpu.vector_store %arg4[%c0_3, %c0_4], %2 {strides = array<i32>} : memref<8x128xf32, #tpu.memory_space<vmem>>, vector<8x128xf32>,
    return
  }
  func.func @transform_0(%arg0: i32, %arg1: i32) -> (i32, i32) {
    %c0_i32 = arith.constant 0 : i32
    %c0_i32_0 = arith.constant 0 : i32
    return %arg0, %c0_i32 : i32, i32
  }
  func.func @transform_1(%arg0: i32, %arg1: i32) -> (i32, i32) {
    %c0_i32 = arith.constant 0 : i32
    %c0_i32_0 = arith.constant 0 : i32
    return %c0_i32, %arg1 : i32, i32
  }
  func.func @transform_2(%arg0: i32, %arg1: i32) -> (i32, i32) {
    %c0_i32 = arith.constant 0 : i32
    return %arg0, %arg1 : i32, i32
  }
}

</mosaic_0001>

<llo_original>
// kernel: _linear_padded.1
$region0: #{_linear_padded.1}
  #allocation0 [shape = 'u32[]', space=smem, size = 0x4, offset = 0x4, fixed_abs, tag = 'smem constant byte address 0x4 - core index']
  #allocation1 [shape = 'u32[144,128]{1,0:T(1,128)}', space=vmem, size = 0x12000, scoped, tag = 'internal scratch']
  %s0 = inlined_call_operand.hbm [shape: f32[8,128], index: 0, kind: input, shape index: {}]
  %s1 = inlined_call_operand.hbm [shape: f32[128,128], index: 1, kind: input, shape index: {}]
  %s2 = inlined_call_operand.hbm [shape: f32[8,128], index: 2, kind: output, shape index: {}]
  %s3 = sld [smem:[#allocation0]]
  $region26: #{_linear_padded.1} parent=0
    _
  %s5 = ssub.s32 1, %s3
  %s6 = scalar_select 0, %s5, %s3
  $region1: #{_linear_padded.1} parent=0
    #allocation2 [shape = 'u8[4096]{0}', space=vmem, size = 0x1000, scoped, tag = 'input window, operand 0, single buffered']
    #allocation3 [shape = 's32[1]{0}', space=sflag, size = 0x4, scoped, tag = 'scoped memory for _linear_padded.1']
    #allocation4 [shape = 's32[1]{0}', space=sflag, size = 0x4, scoped, tag = 'scoped memory for _linear_padded.1']
    #allocation5 [shape = 'u8[65536]{0}', space=vmem, size = 0x10000, scoped, tag = 'input window, operand 1, single buffered']
    #allocation6 [shape = 's32[1]{0}', space=sflag, size = 0x4, scoped, tag = 'scoped memory for _linear_padded.1']
    #allocation7 [shape = 'u8[4096]{0}', space=vmem, size = 0x1000, scoped, tag = 'output window, operand 0, single buffered']
    %7 = vsyncpa [#allocation3], 0
    %8 = vsyncpa [#allocation6], 0
    %9 = vsyncpa [#allocation4], 0
    // Predicated region
    $region2: #{_linear_padded.1} parent=1 // pred_check
      _
    $region3: #{_linear_padded.1} parent=1 // pred_check_branch
      %11 = sbr.rel (0) target = $region5
    $region4: #{_linear_padded.1} parent=1 // pred_region
      %s13 = ssub.s32 128, 128
      %14 = vsyncadd [#allocation3], %s13
      %s16 = sshll.u32 [#allocation2], 4
      %s17 = int_to_ptr.vmem [resolvable:$true] %s16
      %19 = dma.hbm_to_vmem [thread:$0]  %s0, 128, %s17, [#allocation3]
    $region5: #{_linear_padded.1} parent=1 // pred_fallthru
      _
    // Predicated region
    $region6: #{_linear_padded.1} parent=1 // pred_check
      _
    $region7: #{_linear_padded.1} parent=1 // pred_check_branch
      %21 = sbr.rel (0) target = $region9
    $region8: #{_linear_padded.1} parent=1 // pred_region
      %s23 = ssub.s32 2048, 2048
      %24 = vsyncadd [#allocation6], %s23
      %s25 = sshll.u32 [#allocation5], 4
      %s26 = int_to_ptr.vmem [resolvable:$true] %s25
      %31 = dma.hbm_to_vmem [thread:$0]  %s1, 2048, %s26, [#allocation6], 128, 128, 8
    $region9: #{_linear_padded.1} parent=1 // pred_fallthru
      _
    // Predicated region
    $region10: #{_linear_padded.1} parent=1 // pred_check
      _
    $region11: #{_linear_padded.1} parent=1 // pred_check_branch
      %33 = sbr.rel (0) target = $region13
    $region12: #{_linear_padded.1} parent=1 // pred_region
      %34 = dma.done [#allocation3], 128
    $region13: #{_linear_padded.1} parent=1 // pred_fallthru
      _
    // Predicated region
    $region14: #{_linear_padded.1} parent=1 // pred_check
      _
    $region15: #{_linear_padded.1} parent=1 // pred_check_branch
      %36 = sbr.rel (0) target = $region17
    $region16: #{_linear_padded.1} parent=1 // pred_region
      %37 = dma.done [#allocation6], 2048
    $region17: #{_linear_padded.1} parent=1 // pred_fallthru
      _
    %v38 = vld [vmem:[#allocation2] sm:$0xff]
    %v39 = vld [vmem:[#allocation5] sm:$0xff]
    %v40 = vld [vmem:[#allocation5 + $0x8] sm:$0xff]
    %v41 = vld [vmem:[#allocation5 + $0x10] sm:$0xff]
    %v42 = vld [vmem:[#allocation5 + $0x18] sm:$0xff]
    %v43 = vld [vmem:[#allocation5 + $0x20] sm:$0xff]
    %v44 = vld [vmem:[#allocation5 + $0x28] sm:$0xff]
    %v45 = vld [vmem:[#allocation5 + $0x30] sm:$0xff]
    %v46 = vld [vmem:[#allocation5 + $0x38] sm:$0xff]
    %v47 = vld [vmem:[#allocation5 + $0x40] sm:$0xff]
    %v48 = vld [vmem:[#allocation5 + $0x48] sm:$0xff]
    %v49 = vld [vmem:[#allocation5 + $0x50] sm:$0xff]
    %v50 = vld [vmem:[#allocation5 + $0x58] sm:$0xff]
    %v51 = vld [vmem:[#allocation5 + $0x60] sm:$0xff]
    %v52 = vld [vmem:[#allocation5 + $0x68] sm:$0xff]
    %v53 = vld [vmem:[#allocation5 + $0x70] sm:$0xff]
    %v54 = vld [vmem:[#allocation5 + $0x78] sm:$0xff]
    %55 = vmatprep.subr.mxu0 0.0
    %56 = vmatpush1.msra.mxu0 %v54
    %57 = vmatprep.subr.mxu0 0.0
    %58 = vmatpush1.msra.mxu0 %v53
    %59 = vmatprep.subr.mxu0 0.0
    %60 = vmatpush1.msra.mxu0 %v52
    %61 = vmatprep.subr.mxu0 0.0
    %62 = vmatpush1.msra.mxu0 %v51
    %63 = vmatprep.subr.mxu0 0.0
    %64 = vmatpush1.msra.mxu0 %v50
    %65 = vmatprep.subr.mxu0 0.0
    %66 = vmatpush1.msra.mxu0 %v49
    %67 = vmatprep.subr.mxu0 0.0
    %68 = vmatpush1.msra.mxu0 %v48
    %69 = vmatprep.subr.mxu0 0.0
    %70 = vmatpush1.msra.mxu0 %v47
    %71 = vmatprep.subr.mxu0 0.0
    %72 = vmatpush1.msra.mxu0 %v46
    %73 = vmatprep.subr.mxu0 0.0
    %74 = vmatpush1.msra.mxu0 %v45
    %75 = vmatprep.subr.mxu0 0.0
    %76 = vmatpush1.msra.mxu0 %v44
    %77 = vmatprep.subr.mxu0 0.0
    %78 = vmatpush1.msra.mxu0 %v43
    %79 = vmatprep.subr.mxu0 0.0
    %80 = vmatpush1.msra.mxu0 %v42
    %81 = vmatprep.subr.mxu0 0.0
    %82 = vmatpush1.msra.mxu0 %v41
    %83 = vmatprep.subr.mxu0 0.0
    %84 = vmatpush1.msra.mxu0 %v40
    %85 = vmatprep.subr.mxu0 0.0
    %86 = vmatpush1.msra.mxu0 %v39
    %87 = vmatprep.subr.mxu0 0.0
    %88 = vmatpush2.msra.mxu0 0.0
    %89 = vmatprep.subr.mxu0 0.0
    %90 = vmatpush2.msra.mxu0 0.0
    %91 = vmatprep.subr.mxu0 0.0
    %92 = vmatpush2.msra.mxu0 0.0
    %93 = vmatprep.subr.mxu0 0.0
    %94 = vmatpush2.msra.mxu0 0.0
    %95 = vmatprep.subr.mxu0 0.0
    %96 = vmatpush2.msra.mxu0 0.0
    %97 = vmatprep.subr.mxu0 0.0
    %98 = vmatpush2.msra.mxu0 0.0
    %99 = vmatprep.subr.mxu0 0.0
    %100 = vmatpush2.msra.mxu0 0.0
    %101 = vmatprep.subr.mxu0 0.0
    %102 = vmatpush2.msra.mxu0 0.0
    %103 = vmatprep.subr.mxu0 0.0
    %104 = vmatpush2.msra.mxu0 0.0
    %105 = vmatprep.subr.mxu0 0.0
    %106 = vmatpush2.msra.mxu0 0.0
    %107 = vmatprep.subr.mxu0 0.0
    %108 = vmatpush2.msra.mxu0 0.0
    %109 = vmatprep.subr.mxu0 0.0
    %110 = vmatpush2.msra.mxu0 0.0
    %111 = vmatprep.subr.mxu0 0.0
    %112 = vmatpush2.msra.mxu0 0.0
    %113 = vmatprep.subr.mxu0 0.0
    %114 = vmatpush2.msra.mxu0 0.0
    %115 = vmatprep.subr.mxu0 0.0
    %116 = vmatpush2.msra.mxu0 0.0
    %117 = vmatprep.subr.mxu0 0.0
    %118 = vmatpush2.msra.mxu0 0.0
    %119 = vmatprep.mubr.f32.mxu0 0.0
    %120 = vmatmul.mubr.f32.gmra.mxu0 %v38
    %v121 = vpop.f32.mrf.mxu0
    %v122 = vadd.f32 0.0, %v121
    %v123 = vpop.f32.mrf.mxu0
    %124 = vdwg.mxu0
    %125 = vst [vmem:[#allocation7] sm:$0xff] %v122
    // Predicated region
    $region18: #{_linear_padded.1} parent=1 // pred_check
      _
    $region19: #{_linear_padded.1} parent=1 // pred_check_branch
      %127 = sbr.rel (0) target = $region21
    $region20: #{_linear_padded.1} parent=1 // pred_region
      %s129 = ssub.s32 128, 128
      %130 = vsyncadd [#allocation4], %s129
      %s132 = sshll.u32 [#allocation7], 4
      %s133 = int_to_ptr.vmem [resolvable:$true] %s132
      %135 = dma.vmem_to_hbm [thread:$0]  %s133, 128, %s2, [#allocation4]
    $region21: #{_linear_padded.1} parent=1 // pred_fallthru
      _
    // Predicated region
    $region22: #{_linear_padded.1} parent=1 // pred_check
      _
    $region23: #{_linear_padded.1} parent=1 // pred_check_branch
      %137 = sbr.rel (0) target = $region25
    $region24: #{_linear_padded.1} parent=1 // pred_region
      %138 = dma.done [#allocation4], 128
    $region25: #{_linear_padded.1} parent=1 // pred_fallthru
      _
    %139 = vsyncpa [#allocation3], 1
    %140 = vsyncpa [#allocation6], 1
    %141 = vsyncpa [#allocation4], 1

</llo_original>
